<compile_context>
chip_gen: v5e
topology: v5e:2x2
jax: 0.10.0
libtpu: 0.0.40
codegen_flags: <defaults>
</compile_context>

<pallas_src>
import math
import functools

import jax
import jax.numpy as jnp
from jax import lax
from jax.experimental import pallas as pl
from jax.experimental.pallas import tpu as pltpu


# ----------------------------------------------------------------------------
# Fused MSA kernel: one (batch, head) tile per grid step.
# ----------------------------------------------------------------------------
def _msa_kernel(x_ref, wq_ref, wk_ref, wv_ref, bq_ref, bk_ref, bv_ref,
                wp_ref, bp_ref, o_ref, *, scale):
    # x_ref:  (1, N, C)   input tokens for one batch element (resident across heads)
    # wq/wk/wv_ref: (1, C, d)   per-head projection weights
    # bq/bk/bv_ref: (1, 1, d)   per-head projection biases (zeros if qkv_bias=False)
    # wp_ref: (1, d, C)   rows of the output-projection weight for this head
    # bp_ref: (1, C)      output-projection bias
    # o_ref:  (1, N, C)   final output block (accumulated over the head axis)
    h = pl.program_id(1)

    x = x_ref[0]                                                   # (N, C)

    q = jnp.dot(x, wq_ref[0], preferred_element_type=jnp.float32) + bq_ref[0]
    k = jnp.dot(x, wk_ref[0], preferred_element_type=jnp.float32) + bk_ref[0]
    v = jnp.dot(x, wv_ref[0], preferred_element_type=jnp.float32) + bv_ref[0]

    # scores: (N, N) = q @ k^T  (contract the head dim; no explicit transpose)
    s = lax.dot_general(q, k, (((1,), (1,)), ((), ())),
                        preferred_element_type=jnp.float32) * scale
    s = s - jnp.max(s, axis=-1, keepdims=True)
    p = jnp.exp(s)
    p = p / jnp.sum(p, axis=-1, keepdims=True)

    o_h = jnp.dot(p, v, preferred_element_type=jnp.float32)        # (N, d)
    contrib = jnp.dot(o_h, wp_ref[0],
                      preferred_element_type=jnp.float32)          # (N, C)

    @pl.when(h == 0)
    def _():  # initialize the resident output block with the proj bias
        o_ref[0] = jnp.broadcast_to(bp_ref[...], o_ref.shape[1:]).astype(o_ref.dtype)

    o_ref[0] = o_ref[0] + contrib.astype(o_ref.dtype)


def msa_forward_pallas(x, wq3, wk3, wv3, bq3, bk3, bv3, wp3, bp,
                       *, num_heads, scale):
    """x: (B, N, C); head-major weights as produced by MSA.__init__."""
    B, N, C = x.shape
    H = num_heads
    d = C // H
    kernel = functools.partial(_msa_kernel, scale=scale)
    # TODO(synk): tile N (flash-attention style online softmax) for long
    # sequences; full-N blocks assume N*C and N*N tiles fit comfortably in VMEM.
    return pl.pallas_call(
        kernel,
        out_shape=jax.ShapeDtypeStruct((B, N, C), x.dtype),
        grid_spec=pltpu.PrefetchScalarGridSpec(
            num_scalar_prefetch=0,
            grid=(B, H),
            in_specs=[
                pl.BlockSpec((1, N, C), lambda b, h: (b, 0, 0)),   # x (not re-DMA'd across h)
                pl.BlockSpec((1, C, d), lambda b, h: (h, 0, 0)),   # Wq head h
                pl.BlockSpec((1, C, d), lambda b, h: (h, 0, 0)),   # Wk head h
                pl.BlockSpec((1, C, d), lambda b, h: (h, 0, 0)),   # Wv head h
                pl.BlockSpec((1, 1, d), lambda b, h: (h, 0, 0)),   # bq head h
                pl.BlockSpec((1, 1, d), lambda b, h: (h, 0, 0)),   # bk head h
                pl.BlockSpec((1, 1, d), lambda b, h: (h, 0, 0)),   # bv head h
                pl.BlockSpec((1, d, C), lambda b, h: (h, 0, 0)),   # Wproj rows for head h
                pl.BlockSpec((1, C), lambda b, h: (0, 0)),         # proj bias
            ],
            out_specs=pl.BlockSpec((1, N, C), lambda b, h: (b, 0, 0)),
        ),
        compiler_params=pltpu.CompilerParams(
            dimension_semantics=("parallel", "arbitrary"),
            vmem_limit_bytes=32 * 1024 * 1024,
        ),
    )(x, wq3, wk3, wv3, bq3, bk3, bv3, wp3, bp)


# ----------------------------------------------------------------------------
# MSA module (parameters in torch nn.Linear convention, reshaped for the kernel)
# ----------------------------------------------------------------------------
class MSA:
    def __init__(self, dim=192, num_heads=12, qkv_bias=False,
                 attn_drop=0.0, proj_drop=0.0, key=None):
        assert dim % num_heads == 0, "dim should be divisible by num_heads"
        self.dim = dim
        self.num_heads = num_heads
        self.head_dim = dim // num_heads
        self.scale = self.head_dim ** (-0.5)
        self.qkv_bias = qkv_bias
        # attn_drop / proj_drop are identity at p=0.0 (inference); kept for parity.

        key = jax.random.PRNGKey(0) if key is None else key
        k1, k2, k3, k4 = jax.random.split(key, 4)
        bound = 1.0 / math.sqrt(dim)

        # nn.Linear(dim, 3*dim): weight (3C, C), bias (3C,)
        self.w_qkv = jax.random.uniform(k1, (3 * dim, dim),
                                        minval=-bound, maxval=bound, dtype=jnp.float32)
        self.b_qkv = (jax.random.uniform(k2, (3 * dim,), minval=-bound, maxval=bound,
                                         dtype=jnp.float32) if qkv_bias else None)
        # nn.Linear(dim, dim): weight (C, C), bias (C,)
        self.w_proj = jax.random.uniform(k3, (dim, dim),
                                         minval=-bound, maxval=bound, dtype=jnp.float32)
        self.b_proj = jax.random.uniform(k4, (dim,),
                                         minval=-bound, maxval=bound, dtype=jnp.float32)

        H, d, C = num_heads, self.head_dim, dim
        # Head-major kernel layouts (one-time host-side reshape):
        #   q_h = x @ Wq3[h] where Wq3[h] = W_qkv[h*d:(h+1)*d, :].T  -> (H, C, d)
        self.wq3 = self.w_qkv[0 * C:1 * C].reshape(H, d, C).transpose(0, 2, 1)
        self.wk3 = self.w_qkv[1 * C:2 * C].reshape(H, d, C).transpose(0, 2, 1)
        self.wv3 = self.w_qkv[2 * C:3 * C].reshape(H, d, C).transpose(0, 2, 1)
        b_full = self.b_qkv if self.b_qkv is not None else jnp.zeros((3 * C,), jnp.float32)
        self.bq3 = b_full[0 * C:1 * C].reshape(H, 1, d)
        self.bk3 = b_full[1 * C:2 * C].reshape(H, 1, d)
        self.bv3 = b_full[2 * C:3 * C].reshape(H, 1, d)
        # proj contribution of head h: o_h @ Wp3[h], Wp3[h] = W_proj[:, h*d:(h+1)*d].T
        self.wp3 = self.w_proj.T.reshape(H, d, C)                  # (H, d, C)
        self.bp = self.b_proj.reshape(1, C)                        # (1, C)

    def __call__(self, x):
        return msa_forward_pallas(x, self.wq3, self.wk3, self.wv3,
                                  self.bq3, self.bk3, self.bv3,
                                  self.wp3, self.bp,
                                  num_heads=self.num_heads, scale=self.scale)


# ----------------------------------------------------------------------------
# Pure-JAX reference (mirrors the PyTorch forward op-for-op)
# ----------------------------------------------------------------------------
def msa_reference(layer, x):
    B, N, C = x.shape
    H, d = layer.num_heads, layer.head_dim
    qkv = x @ layer.w_qkv.T
    if layer.b_qkv is not None:
        qkv = qkv + layer.b_qkv
    qkv = qkv.reshape(B, N, 3, H, d).transpose(2, 0, 3, 1, 4)      # (3, B, H, N, d)
    q, k, v = qkv[0], qkv[1], qkv[2]
    attn = jnp.einsum("bhnd,bhmd->bhnm", q, k) * layer.scale
    attn = jax.nn.softmax(attn, axis=-1)
    out = jnp.einsum("bhnm,bhmd->bhnd", attn, v)
    out = out.transpose(0, 2, 1, 3).reshape(B, N, C)
    return out @ layer.w_proj.T + layer.b_proj


if __name__ == "__main__":
    key = jax.random.PRNGKey(0)
    k_param, k_x = jax.random.split(key)

    B, N, dim, num_heads = 2, 8, 32, 4   # small shapes consistent with the module

    layer = MSA(dim=dim, num_heads=num_heads, qkv_bias=False,
                attn_drop=0.0, proj_drop=0.0, key=k_param)

    x = jax.random.normal(k_x, (B, N, dim), dtype=jnp.float32)

    y = layer(x)
    y = jax.block_until_ready(y)

    y_ref = msa_reference(layer, x)
    assert y.shape == (B, N, dim), y.shape
    assert jnp.allclose(y, y_ref, atol=1e-4, rtol=1e-4), float(jnp.max(jnp.abs(y - y_ref)))

    print("KERNEL_OK")
</pallas_src>

<mosaic_0001>
module attributes {stable_mosaic.version = 11 : i64} {
  func.func @_msa_kernel(%arg0: i32, %arg1: i32, %arg2: memref<1x8x32xf32, #tpu.memory_space<vmem>>, %arg3: memref<1x32x8xf32, #tpu.memory_space<vmem>>, %arg4: memref<1x32x8xf32, #tpu.memory_space<vmem>>, %arg5: memref<1x32x8xf32, #tpu.memory_space<vmem>>, %arg6: memref<1x1x8xf32, #tpu.memory_space<vmem>>, %arg7: memref<1x1x8xf32, #tpu.memory_space<vmem>>, %arg8: memref<1x1x8xf32, #tpu.memory_space<vmem>>, %arg9: memref<1x8x32xf32, #tpu.memory_space<vmem>>, %arg10: memref<1x32xf32, #tpu.memory_space<vmem>>, %arg11: memref<1x8x32xf32, #tpu.memory_space<vmem>>) attributes {dimension_semantics = [#tpu.dimension_semantics<parallel>, #tpu.dimension_semantics<arbitrary>], iteration_bounds = array<i64: 2, 4>, scalar_prefetch = 0 : i64, scratch_operands = 0 : i64, tpu.core_type = #tpu.core_type<tc>, window_params = [{transform_indices = @transform_0, window_bounds = array<i64: 1, 8, 32>}, {transform_indices = @transform_1, window_bounds = array<i64: 1, 32, 8>}, {transform_indices = @transform_2, window_bounds = array<i64: 1, 32, 8>}, {transform_indices = @transform_3, window_bounds = array<i64: 1, 32, 8>}, {transform_indices = @transform_4, window_bounds = array<i64: 1, 1, 8>}, {transform_indices = @transform_5, window_bounds = array<i64: 1, 1, 8>}, {transform_indices = @transform_6, window_bounds = array<i64: 1, 1, 8>}, {transform_indices = @transform_7, window_bounds = array<i64: 1, 8, 32>}, {pipeline_mode = #tpu.pipeline_mode<synchronous>, transform_indices = @transform_8, window_bounds = array<i64: 1, 32>}, {transform_indices = @transform_9, window_bounds = array<i64: 1, 8, 32>}]} {
    %c0 = arith.constant 0 : index
    %c0_0 = arith.constant 0 : index
    %c0_1 = arith.constant 0 : index
    %0 = vector.load %arg2[%c0, %c0_0, %c0_1] : memref<1x8x32xf32, #tpu.memory_space<vmem>>, vector<1x8x32xf32>
    %1 = vector.shape_cast %0 : vector<1x8x32xf32> to vector<8x32xf32>
    %c0_2 = arith.constant 0 : index
    %c0_3 = arith.constant 0 : index
    %c0_4 = arith.constant 0 : index
    %2 = vector.load %arg3[%c0_2, %c0_3, %c0_4] : memref<1x32x8xf32, #tpu.memory_space<vmem>>, vector<1x32x8xf32>
    %3 = vector.shape_cast %2 : vector<1x32x8xf32> to vector<32x8xf32>
    %cst = arith.constant dense<0.000000e+00> : vector<8x8xf32>
    %4 = tpu.matmul %1, %3, %cst {dimension_numbers = #tpu.dot_dimension_numbers<[1], [0], [0], [1], [0, 0, 1, 1], [], []>} : vector<8x32xf32>, vector<32x8xf32>, vector<8x8xf32> -> vector<8x8xf32>
    %c0_5 = arith.constant 0 : index
    %c0_6 = arith.constant 0 : index
    %c0_7 = arith.constant 0 : index
    %5 = vector.load %arg6[%c0_5, %c0_6, %c0_7] : memref<1x1x8xf32, #tpu.memory_space<vmem>>, vector<1x1x8xf32>
    %6 = vector.shape_cast %5 : vector<1x1x8xf32> to vector<1x8xf32>
    %7 = vector.broadcast %6 : vector<1x8xf32> to vector<8x8xf32>
    %8 = arith.addf %4, %7 : vector<8x8xf32>
    %c0_8 = arith.constant 0 : index
    %c0_9 = arith.constant 0 : index
    %c0_10 = arith.constant 0 : index
    %9 = vector.load %arg4[%c0_8, %c0_9, %c0_10] : memref<1x32x8xf32, #tpu.memory_space<vmem>>, vector<1x32x8xf32>
    %10 = vector.shape_cast %9 : vector<1x32x8xf32> to vector<32x8xf32>
    %cst_11 = arith.constant dense<0.000000e+00> : vector<8x8xf32>
    %11 = tpu.matmul %1, %10, %cst_11 {dimension_numbers = #tpu.dot_dimension_numbers<[1], [0], [0], [1], [0, 0, 1, 1], [], []>} : vector<8x32xf32>, vector<32x8xf32>, vector<8x8xf32> -> vector<8x8xf32>
    %c0_12 = arith.constant 0 : index
    %c0_13 = arith.constant 0 : index
    %c0_14 = arith.constant 0 : index
    %12 = vector.load %arg7[%c0_12, %c0_13, %c0_14] : memref<1x1x8xf32, #tpu.memory_space<vmem>>, vector<1x1x8xf32>
    %13 = vector.shape_cast %12 : vector<1x1x8xf32> to vector<1x8xf32>
    %14 = vector.broadcast %13 : vector<1x8xf32> to vector<8x8xf32>
    %15 = arith.addf %11, %14 : vector<8x8xf32>
    %c0_15 = arith.constant 0 : index
    %c0_16 = arith.constant 0 : index
    %c0_17 = arith.constant 0 : index
    %16 = vector.load %arg5[%c0_15, %c0_16, %c0_17] : memref<1x32x8xf32, #tpu.memory_space<vmem>>, vector<1x32x8xf32>
    %17 = vector.shape_cast %16 : vector<1x32x8xf32> to vector<32x8xf32>
    %cst_18 = arith.constant dense<0.000000e+00> : vector<8x8xf32>
    %18 = tpu.matmul %1, %17, %cst_18 {dimension_numbers = #tpu.dot_dimension_numbers<[1], [0], [0], [1], [0, 0, 1, 1], [], []>} : vector<8x32xf32>, vector<32x8xf32>, vector<8x8xf32> -> vector<8x8xf32>
    %c0_19 = arith.constant 0 : index
    %c0_20 = arith.constant 0 : index
    %c0_21 = arith.constant 0 : index
    %19 = vector.load %arg8[%c0_19, %c0_20, %c0_21] : memref<1x1x8xf32, #tpu.memory_space<vmem>>, vector<1x1x8xf32>
    %20 = vector.shape_cast %19 : vector<1x1x8xf32> to vector<1x8xf32>
    %21 = vector.broadcast %20 : vector<1x8xf32> to vector<8x8xf32>
    %22 = arith.addf %18, %21 : vector<8x8xf32>
    %cst_22 = arith.constant dense<0.000000e+00> : vector<8x8xf32>
    %23 = tpu.matmul %8, %15, %cst_22 {dimension_numbers = #tpu.dot_dimension_numbers<[1], [1], [0], [0], [0, 0, 1, 0], [], []>} : vector<8x8xf32>, vector<8x8xf32>, vector<8x8xf32> -> vector<8x8xf32>
    %cst_23 = arith.constant 0.353553385 : f32
    %24 = vector.broadcast %cst_23 : f32 to vector<8x8xf32>
    %25 = arith.mulf %23, %24 : vector<8x8xf32>
    %cst_24 = arith.constant dense<0xFF800000> : vector<8xf32>
    %26 = vector.multi_reduction <maximumf>, %25, %cst_24 [1] : vector<8x8xf32> to vector<8xf32>
    %27 = vector.shape_cast %26 : vector<8xf32> to vector<8x1xf32>
    %28 = vector.broadcast %27 : vector<8x1xf32> to vector<8x8xf32>
    %29 = arith.subf %25, %28 : vector<8x8xf32>
    %30 = math.exp %29 : vector<8x8xf32>
    %cst_25 = arith.constant dense<0.000000e+00> : vector<8xf32>
    %31 = vector.multi_reduction <add>, %30, %cst_25 [1] : vector<8x8xf32> to vector<8xf32>
    %32 = vector.shape_cast %31 : vector<8xf32> to vector<8x1xf32>
    %33 = vector.broadcast %32 : vector<8x1xf32> to vector<8x8xf32>
    %34 = arith.divf %30, %33 : vector<8x8xf32>
    %cst_26 = arith.constant dense<0.000000e+00> : vector<8x8xf32>
    %35 = tpu.matmul %34, %22, %cst_26 {dimension_numbers = #tpu.dot_dimension_numbers<[1], [0], [0], [1], [0, 0, 1, 1], [], []>} : vector<8x8xf32>, vector<8x8xf32>, vector<8x8xf32> -> vector<8x8xf32>
    %c0_27 = arith.constant 0 : index
    %c0_28 = arith.constant 0 : index
    %c0_29 = arith.constant 0 : index
    %36 = vector.load %arg9[%c0_27, %c0_28, %c0_29] : memref<1x8x32xf32, #tpu.memory_space<vmem>>, vector<1x8x32xf32>
    %37 = vector.shape_cast %36 : vector<1x8x32xf32> to vector<8x32xf32>
    %cst_30 = arith.constant dense<0.000000e+00> : vector<8x32xf32>
    %38 = tpu.matmul %35, %37, %cst_30 {dimension_numbers = #tpu.dot_dimension_numbers<[1], [0], [0], [1], [0, 0, 1, 1], [], []>} : vector<8x8xf32>, vector<8x32xf32>, vector<8x32xf32> -> vector<8x32xf32>
    %c0_i32 = arith.constant 0 : i32
    %39 = arith.cmpi eq, %arg1, %c0_i32 : i32
    %40 = arith.extui %39 : i1 to i32
    %c0_i32_31 = arith.constant 0 : i32
    %41 = arith.cmpi ne, %40, %c0_i32_31 : i32
    scf.if %41 {
      %c0_38 = arith.constant 0 : index
      %c0_39 = arith.constant 0 : index
      %48 = vector.load %arg10[%c0_38, %c0_39] : memref<1x32xf32, #tpu.memory_space<vmem>>, vector<1x32xf32>
      %49 = vector.shape_cast %48 : vector<1x32xf32> to vector<1x32xf32>
      %50 = vector.broadcast %49 : vector<1x32xf32> to vector<8x32xf32>
      %c0_40 = arith.constant 0 : index
      %c0_41 = arith.constant 0 : index
      %c0_42 = arith.constant 0 : index
      %51 = vector.load %arg11[%c0_40, %c0_41, %c0_42] : memref<1x8x32xf32, #tpu.memory_space<vmem>>, vector<1x8x32xf32>
      %52 = vector.shape_cast %51 : vector<1x8x32xf32> to vector<8x32xf32>
      %53 = vector.shape_cast %50 : vector<8x32xf32> to vector<1x8x32xf32>
      tpu.vector_store %arg11[%c0_40, %c0_41, %c0_42], %53 {strides = array<i32>} : memref<1x8x32xf32, #tpu.memory_space<vmem>>, vector<1x8x32xf32>,
    } else {
    }
    %c0_32 = arith.constant 0 : index
    %c0_33 = arith.constant 0 : index
    %c0_34 = arith.constant 0 : index
    %42 = vector.load %arg11[%c0_32, %c0_33, %c0_34] : memref<1x8x32xf32, #tpu.memory_space<vmem>>, vector<1x8x32xf32>
    %43 = vector.shape_cast %42 : vector<1x8x32xf32> to vector<8x32xf32>
    %44 = arith.addf %43, %38 : vector<8x32xf32>
    %c0_35 = arith.constant 0 : index
    %c0_36 = arith.constant 0 : index
    %c0_37 = arith.constant 0 : index
    %45 = vector.load %arg11[%c0_35, %c0_36, %c0_37] : memref<1x8x32xf32, #tpu.memory_space<vmem>>, vector<1x8x32xf32>
    %46 = vector.shape_cast %45 : vector<1x8x32xf32> to vector<8x32xf32>
    %47 = vector.shape_cast %44 : vector<8x32xf32> to vector<1x8x32xf32>
    tpu.vector_store %arg11[%c0_35, %c0_36, %c0_37], %47 {strides = array<i32>} : memref<1x8x32xf32, #tpu.memory_space<vmem>>, vector<1x8x32xf32>,
    return
  }
  func.func @transform_0(%arg0: i32, %arg1: i32) -> (i32, i32, i32) {
    %c0_i32 = arith.constant 0 : i32
    %c0_i32_0 = arith.constant 0 : i32
    %c0_i32_1 = arith.constant 0 : i32
    return %arg0, %c0_i32, %c0_i32_0 : i32, i32, i32
  }
  func.func @transform_1(%arg0: i32, %arg1: i32) -> (i32, i32, i32) {
    %c0_i32 = arith.constant 0 : i32
    %c0_i32_0 = arith.constant 0 : i32
    %c0_i32_1 = arith.constant 0 : i32
    return %arg1, %c0_i32, %c0_i32_0 : i32, i32, i32
  }
  func.func @transform_2(%arg0: i32, %arg1: i32) -> (i32, i32, i32) {
    %c0_i32 = arith.constant 0 : i32
    %c0_i32_0 = arith.constant 0 : i32
    %c0_i32_1 = arith.constant 0 : i32
    return %arg1, %c0_i32, %c0_i32_0 : i32, i32, i32
  }
  func.func @transform_3(%arg0: i32, %arg1: i32) -> (i32, i32, i32) {
    %c0_i32 = arith.constant 0 : i32
    %c0_i32_0 = arith.constant 0 : i32
    %c0_i32_1 = arith.constant 0 : i32
    return %arg1, %c0_i32, %c0_i32_0 : i32, i32, i32
  }
  func.func @transform_4(%arg0: i32, %arg1: i32) -> (i32, i32, i32) {
    %c0_i32 = arith.constant 0 : i32
    %c0_i32_0 = arith.constant 0 : i32
    %c0_i32_1 = arith.constant 0 : i32
    return %arg1, %c0_i32, %c0_i32_0 : i32, i32, i32
  }
  func.func @transform_5(%arg0: i32, %arg1: i32) -> (i32, i32, i32) {
    %c0_i32 = arith.constant 0 : i32
    %c0_i32_0 = arith.constant 0 : i32
    %c0_i32_1 = arith.constant 0 : i32
    return %arg1, %c0_i32, %c0_i32_0 : i32, i32, i32
  }
  func.func @transform_6(%arg0: i32, %arg1: i32) -> (i32, i32, i32) {
    %c0_i32 = arith.constant 0 : i32
    %c0_i32_0 = arith.constant 0 : i32
    %c0_i32_1 = arith.constant 0 : i32
    return %arg1, %c0_i32, %c0_i32_0 : i32, i32, i32
  }
  func.func @transform_7(%arg0: i32, %arg1: i32) -> (i32, i32, i32) {
    %c0_i32 = arith.constant 0 : i32
    %c0_i32_0 = arith.constant 0 : i32
    %c0_i32_1 = arith.constant 0 : i32
    return %arg1, %c0_i32, %c0_i32_0 : i32, i32, i32
  }
  func.func @transform_8(%arg0: i32, %arg1: i32) -> (i32, i32) {
    %c0_i32 = arith.constant 0 : i32
    %c0_i32_0 = arith.constant 0 : i32
    %c0_i32_1 = arith.constant 0 : i32
    return %c0_i32, %c0_i32_0 : i32, i32
  }
  func.func @transform_9(%arg0: i32, %arg1: i32) -> (i32, i32, i32) {
    %c0_i32 = arith.constant 0 : i32
    %c0_i32_0 = arith.constant 0 : i32
    %c0_i32_1 = arith.constant 0 : i32
    return %arg0, %c0_i32, %c0_i32_0 : i32, i32, i32
  }
}

</mosaic_0001>

<llo_original>
// kernel: tpu_custom_call.1
$region0: #{tpu_custom_call.1}
  #allocation0 [shape = 'u32[]', space=smem, size = 0x4, offset = 0x4, fixed_abs, tag = 'smem constant byte address 0x4 - core index']
  #allocation1 [shape = 'u32[72,128]{1,0:T(1,128)}', space=vmem, size = 0x9000, scoped, tag = 'internal scratch']
  %s0 = inlined_call_operand.vmem [shape: f32[2,8,32], index: 0, kind: input, shape index: {}]
  %s1 = inlined_call_operand.vmem [shape: f32[4,32,8], index: 1, kind: input, shape index: {}]
  %s2 = inlined_call_operand.vmem [shape: f32[4,32,8], index: 2, kind: input, shape index: {}]
  %s3 = inlined_call_operand.vmem [shape: f32[4,32,8], index: 3, kind: input, shape index: {}]
  %s4 = inlined_call_operand.vmem [shape: f32[4,1,8], index: 4, kind: input, shape index: {}]
  %s5 = inlined_call_operand.vmem [shape: f32[4,1,8], index: 5, kind: input, shape index: {}]
  %s6 = inlined_call_operand.vmem [shape: f32[4,1,8], index: 6, kind: input, shape index: {}]
  %s7 = inlined_call_operand.vmem [shape: f32[4,8,32], index: 7, kind: input, shape index: {}]
  %s8 = inlined_call_operand.vmem [shape: f32[1,32], index: 8, kind: input, shape index: {}]
  %s9 = inlined_call_operand.hbm [shape: f32[2,8,32], index: 9, kind: output, shape index: {}]
  %s10 = sld [smem:[#allocation0]]
  $region73: #{tpu_custom_call.1} parent=0
    _
  %s12 = ssub.s32 1, %s10
  %s13 = scalar_select 0, %s12, %s10
  $region1: #{tpu_custom_call.1} parent=0
    #allocation2 [shape = 'u8[8192]{0}', space=vmem, size = 0x2000, scoped, tag = 'output window, operand 0']
    #allocation3 [shape = 's32[2]{0}', space=sflag, size = 0x8, scoped, tag = 'scoped memory for tpu_custom_call.1']
    %14 = vsyncpa [#allocation3], 0
    %s15 = scalar_lea.sflag [#allocation3], 1
    %16 = vsyncpa %s15, 0
    loop: start=0, step=1, limit=10
    $region2: #{tpu_custom_call.1} parent=1 // loop_pre_header
      _
    $region3: #{tpu_custom_call.1} parent=1 // loop_header
      %s18 = sphi 0, %s22
      %p19 = scmp.ge.s32.totalorder %s18, 10
      %s25 = sphi 0, %s37
      %s26 = sphi 0, %s33
      %s27 = sphi 0, %s25
      %s28 = sphi 0, %s26
      %s29 = sphi 0, %s27
      %s30 = sphi 0, %s28
      %s40 = sphi 0, %s42
      %s43 = sphi 0, %s40
      %s44 = sphi 0, %s43
      %s60 = sphi 0, %s44
      %s66 = sphi 0, %s68
      %s69 = sphi 0, %s66
      %s70 = sphi 0, %s69
      %s86 = sphi 0, %s70
      %s92 = sphi 0, %s94
      %s95 = sphi 0, %s92
      %s96 = sphi 0, %s95
      %s112 = sphi 0, %s96
      %s118 = sphi 0, %s120
      %s121 = sphi 0, %s118
      %s122 = sphi 0, %s121
      %s138 = sphi 0, %s122
      %s144 = sphi 0, %s146
      %s147 = sphi 0, %s144
      %s148 = sphi 0, %s147
      %s164 = sphi 0, %s148
      %s170 = sphi 0, %s172
      %s173 = sphi 0, %s170
      %s174 = sphi 0, %s173
      %s190 = sphi 0, %s174
      %s196 = sphi 0, %s198
      %s199 = sphi 0, %s196
      %s200 = sphi 0, %s199
      %s216 = sphi 0, %s200
      %s222 = sphi 0, %s224
      %s225 = sphi 0, %s222
      %s226 = sphi 0, %s225
      %s242 = sphi 0, %s226
      %s246 = sphi 0, %s246
      %s248 = sphi 0, %s246
      %s249 = sphi 0, %s248
      %s263 = sphi 0, %s249
      %s269 = sphi 0, %s271
      %s272 = sphi 0, %s269
      %s273 = sphi 0, %s272
      %s289 = sphi 0, %s273
    $region4: #{tpu_custom_call.1} parent=1 // loop_header_branch
      %21 = sbr.rel (%p19) target = $region8
    $region5: #{tpu_custom_call.1} parent=1 // loop_body
      %s23 = ssub.s32 %s18, 1
      %s24 = ssub.s32 %s18, 2
      %s31 = sadd.s32 1, %s26
      %p32 = scmp.ge.s32.totalorder %s31, 4
      %s33 = scalar_select %p32, 0, %s31
      %s34 = sadd.s32 1, %s25
      %s35 = scalar_select %p32, %s34, %s25
      %p36 = scmp.ge.s32.totalorder %s35, 2
      %s37 = scalar_select %p36, 0, %s35
      %s38 = ssub.s32 %s25, %s37
      %p39 = scmp.eq.s32.totalorder %s38, 0
      %s41 = sadd.s32 %s40, 1
      %s42 = scalar_select %p39, %s40, %s41
      %p45 = pneg %p39
      %p46 = scmp.eq.s32.totalorder %s18, 7
      %p47 = por %p45, %p46
      %p48 = scmp.ne.s32.totalorder %s40, %s43
      %p49 = scmp.eq.s32.totalorder %s18, 0
      %p50 = por %p48, %p49
      %p51 = scmp.ne.s32.totalorder %s40, %s43
      %p52 = scmp.eq.s32.totalorder %s23, 7
      %p53 = por %p51, %p52
      %p54 = scmp.ne.s32.totalorder %s43, %s44
      %p55 = scmp.eq.s32.totalorder %s23, 0
      %p56 = por %p54, %p55
      %p57 = scmp.ne.s32.totalorder %s43, %s44
      %p58 = scmp.eq.s32.totalorder %s24, 7
      %p59 = por %p57, %p58
      %p61 = scmp.ne.s32.totalorder %s44, %s60
      %p62 = scmp.eq.s32.totalorder %s24, 0
      %p63 = por %p61, %p62
      %s64 = ssub.s32 %s26, %s33
      %p65 = scmp.eq.s32.totalorder %s64, 0
      %s67 = sadd.s32 %s66, 1
      %s68 = scalar_select %p65, %s66, %s67
      %p71 = pneg %p65
      %p72 = scmp.eq.s32.totalorder %s18, 7
      %p73 = por %p71, %p72
      %p74 = scmp.ne.s32.totalorder %s66, %s69
      %p75 = scmp.eq.s32.totalorder %s18, 0
      %p76 = por %p74, %p75
      %p77 = scmp.ne.s32.totalorder %s66, %s69
      %p78 = scmp.eq.s32.totalorder %s23, 7
      %p79 = por %p77, %p78
      %p80 = scmp.ne.s32.totalorder %s69, %s70
      %p81 = scmp.eq.s32.totalorder %s23, 0
      %p82 = por %p80, %p81
      %p83 = scmp.ne.s32.totalorder %s69, %s70
      %p84 = scmp.eq.s32.totalorder %s24, 7
      %p85 = por %p83, %p84
      %p87 = scmp.ne.s32.totalorder %s70, %s86
      %p88 = scmp.eq.s32.totalorder %s24, 0
      %p89 = por %p87, %p88
      %s90 = ssub.s32 %s26, %s33
      %p91 = scmp.eq.s32.totalorder %s90, 0
      %s93 = sadd.s32 %s92, 1
      %s94 = scalar_select %p91, %s92, %s93
      %p97 = pneg %p91
      %p98 = scmp.eq.s32.totalorder %s18, 7
      %p99 = por %p97, %p98
      %p100 = scmp.ne.s32.totalorder %s92, %s95
      %p101 = scmp.eq.s32.totalorder %s18, 0
      %p102 = por %p100, %p101
      %p103 = scmp.ne.s32.totalorder %s92, %s95
      %p104 = scmp.eq.s32.totalorder %s23, 7
      %p105 = por %p103, %p104
      %p106 = scmp.ne.s32.totalorder %s95, %s96
      %p107 = scmp.eq.s32.totalorder %s23, 0
      %p108 = por %p106, %p107
      %p109 = scmp.ne.s32.totalorder %s95, %s96
      %p110 = scmp.eq.s32.totalorder %s24, 7
      %p111 = por %p109, %p110
      %p113 = scmp.ne.s32.totalorder %s96, %s112
      %p114 = scmp.eq.s32.totalorder %s24, 0
      %p115 = por %p113, %p114
      %s116 = ssub.s32 %s26, %s33
      %p117 = scmp.eq.s32.totalorder %s116, 0
      %s119 = sadd.s32 %s118, 1
      %s120 = scalar_select %p117, %s118, %s119
      %p123 = pneg %p117
      %p124 = scmp.eq.s32.totalorder %s18, 7
      %p125 = por %p123, %p124
      %p126 = scmp.ne.s32.totalorder %s118, %s121
      %p127 = scmp.eq.s32.totalorder %s18, 0
      %p128 = por %p126, %p127
      %p129 = scmp.ne.s32.totalorder %s118, %s121
      %p130 = scmp.eq.s32.totalorder %s23, 7
      %p131 = por %p129, %p130
      %p132 = scmp.ne.s32.totalorder %s121, %s122
      %p133 = scmp.eq.s32.totalorder %s23, 0
      %p134 = por %p132, %p133
      %p135 = scmp.ne.s32.totalorder %s121, %s122
      %p136 = scmp.eq.s32.totalorder %s24, 7
      %p137 = por %p135, %p136
      %p139 = scmp.ne.s32.totalorder %s122, %s138
      %p140 = scmp.eq.s32.totalorder %s24, 0
      %p141 = por %p139, %p140
      %s142 = ssub.s32 %s26, %s33
      %p143 = scmp.eq.s32.totalorder %s142, 0
      %s145 = sadd.s32 %s144, 1
      %s146 = scalar_select %p143, %s144, %s145
      %p149 = pneg %p143
      %p150 = scmp.eq.s32.totalorder %s18, 7
      %p151 = por %p149, %p150
      %p152 = scmp.ne.s32.totalorder %s144, %s147
      %p153 = scmp.eq.s32.totalorder %s18, 0
      %p154 = por %p152, %p153
      %p155 = scmp.ne.s32.totalorder %s144, %s147
      %p156 = scmp.eq.s32.totalorder %s23, 7
      %p157 = por %p155, %p156
      %p158 = scmp.ne.s32.totalorder %s147, %s148
      %p159 = scmp.eq.s32.totalorder %s23, 0
      %p160 = por %p158, %p159
      %p161 = scmp.ne.s32.totalorder %s147, %s148
      %p162 = scmp.eq.s32.totalorder %s24, 7
      %p163 = por %p161, %p162
      %p165 = scmp.ne.s32.totalorder %s148, %s164
      %p166 = scmp.eq.s32.totalorder %s24, 0
      %p167 = por %p165, %p166
      %s168 = ssub.s32 %s26, %s33
      %p169 = scmp.eq.s32.totalorder %s168, 0
      %s171 = sadd.s32 %s170, 1
      %s172 = scalar_select %p169, %s170, %s171
      %p175 = pneg %p169
      %p176 = scmp.eq.s32.totalorder %s18, 7
      %p177 = por %p175, %p176
      %p178 = scmp.ne.s32.totalorder %s170, %s173
      %p179 = scmp.eq.s32.totalorder %s18, 0
      %p180 = por %p178, %p179
      %p181 = scmp.ne.s32.totalorder %s170, %s173
      %p182 = scmp.eq.s32.totalorder %s23, 7
      %p183 = por %p181, %p182
      %p184 = scmp.ne.s32.totalorder %s173, %s174
      %p185 = scmp.eq.s32.totalorder %s23, 0
      %p186 = por %p184, %p185
      %p187 = scmp.ne.s32.totalorder %s173, %s174
      %p188 = scmp.eq.s32.totalorder %s24, 7
      %p189 = por %p187, %p188
      %p191 = scmp.ne.s32.totalorder %s174, %s190
      %p192 = scmp.eq.s32.totalorder %s24, 0
      %p193 = por %p191, %p192
      %s194 = ssub.s32 %s26, %s33
      %p195 = scmp.eq.s32.totalorder %s194, 0
      %s197 = sadd.s32 %s196, 1
      %s198 = scalar_select %p195, %s196, %s197
      %p201 = pneg %p195
      %p202 = scmp.eq.s32.totalorder %s18, 7
      %p203 = por %p201, %p202
      %p204 = scmp.ne.s32.totalorder %s196, %s199
      %p205 = scmp.eq.s32.totalorder %s18, 0
      %p206 = por %p204, %p205
      %p207 = scmp.ne.s32.totalorder %s196, %s199
      %p208 = scmp.eq.s32.totalorder %s23, 7
      %p209 = por %p207, %p208
      %p210 = scmp.ne.s32.totalorder %s199, %s200
      %p211 = scmp.eq.s32.totalorder %s23, 0
      %p212 = por %p210, %p211
      %p213 = scmp.ne.s32.totalorder %s199, %s200
      %p214 = scmp.eq.s32.totalorder %s24, 7
      %p215 = por %p213, %p214
      %p217 = scmp.ne.s32.totalorder %s200, %s216
      %p218 = scmp.eq.s32.totalorder %s24, 0
      %p219 = por %p217, %p218
      %s220 = ssub.s32 %s26, %s33
      %p221 = scmp.eq.s32.totalorder %s220, 0
      %s223 = sadd.s32 %s222, 1
      %s224 = scalar_select %p221, %s222, %s223
      %p227 = pneg %p221
      %p228 = scmp.eq.s32.totalorder %s18, 7
      %p229 = por %p227, %p228
      %p230 = scmp.ne.s32.totalorder %s222, %s225
      %p231 = scmp.eq.s32.totalorder %s18, 0
      %p232 = por %p230, %p231
      %p233 = scmp.ne.s32.totalorder %s222, %s225
      %p234 = scmp.eq.s32.totalorder %s23, 7
      %p235 = por %p233, %p234
      %p236 = scmp.ne.s32.totalorder %s225, %s226
      %p237 = scmp.eq.s32.totalorder %s23, 0
      %p238 = por %p236, %p237
      %p239 = scmp.ne.s32.totalorder %s225, %s226
      %p240 = scmp.eq.s32.totalorder %s24, 7
      %p241 = por %p239, %p240
      %p243 = scmp.ne.s32.totalorder %s226, %s242
      %p244 = scmp.eq.s32.totalorder %s24, 0
      %p245 = por %p243, %p244
      %s247 = sadd.s32 %s246, 1
      %p250 = scmp.eq.s32.totalorder %s18, 7
      %p251 = scmp.ne.s32.totalorder %s246, %s248
      %p252 = scmp.eq.s32.totalorder %s18, 0
      %p253 = por %p251, %p252
      %p254 = scmp.ne.s32.totalorder %s246, %s248
      %p255 = scmp.eq.s32.totalorder %s23, 7
      %p256 = por %p254, %p255
      %p257 = scmp.ne.s32.totalorder %s248, %s249
      %p258 = scmp.eq.s32.totalorder %s23, 0
      %p259 = por %p257, %p258
      %p260 = scmp.ne.s32.totalorder %s248, %s249
      %p261 = scmp.eq.s32.totalorder %s24, 7
      %p262 = por %p260, %p261
      %p264 = scmp.ne.s32.totalorder %s249, %s263
      %p265 = scmp.eq.s32.totalorder %s24, 0
      %p266 = por %p264, %p265
      %s267 = ssub.s32 %s25, %s37
      %p268 = scmp.eq.s32.totalorder %s267, 0
      %s270 = sadd.s32 %s269, 1
      %s271 = scalar_select %p268, %s269, %s270
      %p274 = pneg %p268
      %p275 = scmp.eq.s32.totalorder %s18, 7
      %p276 = por %p274, %p275
      %p277 = scmp.ne.s32.totalorder %s269, %s272
      %p278 = scmp.eq.s32.totalorder %s18, 0
      %p279 = por %p277, %p278
      %p280 = scmp.ne.s32.totalorder %s269, %s272
      %p281 = scmp.eq.s32.totalorder %s23, 7
      %p282 = por %p280, %p281
      %p283 = scmp.ne.s32.totalorder %s272, %s273
      %p284 = scmp.eq.s32.totalorder %s23, 0
      %p285 = por %p283, %p284
      %p286 = scmp.ne.s32.totalorder %s272, %s273
      %p287 = scmp.eq.s32.totalorder %s24, 7
      %p288 = por %p286, %p287
      %p290 = scmp.ne.s32.totalorder %s273, %s289
      %p291 = scmp.eq.s32.totalorder %s24, 0
      %p292 = por %p290, %p291
      %p293 = scmp.le.s32.totalorder 1, %s18
      %p294 = scmp.lt.s32.totalorder %s18, 9
      %p295 = pnand %p293, %p294
      %p296 = pneg %p295
      // Predicated region
      $region9: #{tpu_custom_call.1} parent=5 // pred_check
        _
      $region10: #{tpu_custom_call.1} parent=5 // pred_check_branch
        %298 = sbr.rel (%p295) target = $region12
      $region11: #{tpu_custom_call.1} parent=5 // pred_region
        %s299 = ssub.s32 %s18, 1
        // Predicated region
        $region13: #{tpu_custom_call.1} parent=11 // pred_check
          %p300 = pneg %p259
        $region14: #{tpu_custom_call.1} parent=11 // pred_check_branch
          %302 = sbr.rel (%p300) target = $region16
        $region15: #{tpu_custom_call.1} parent=11 // pred_region
          _
        $region16: #{tpu_custom_call.1} parent=11 // pred_fallthru
          _
      $region12: #{tpu_custom_call.1} parent=5 // pred_fallthru
        _
      %p303 = scmp.lt.s32.totalorder %s18, 8
      // Predicated region
      $region17: #{tpu_custom_call.1} parent=5 // pred_check
        %p304 = pneg %p303
      $region18: #{tpu_custom_call.1} parent=5 // pred_check_branch
        %306 = sbr.rel (%p304) target = $region20
      $region19: #{tpu_custom_call.1} parent=5 // pred_region
        // Predicated region
        $region21: #{tpu_custom_call.1} parent=19 // pred_check
          %p307 = pneg %p50
        $region22: #{tpu_custom_call.1} parent=19 // pred_check_branch
          %309 = sbr.rel (%p307) target = $region24
        $region23: #{tpu_custom_call.1} parent=19 // pred_region
          %p310 = scmp.lt.s32.totalorder %s25, 1
          %s311 = scalar_select %p310, %s25, 1
          %s312 = smul.addr %s311, 8
          %s313 = scalar_lea.vmem %s0, %s312
        $region24: #{tpu_custom_call.1} parent=19 // pred_fallthru
          _
        // Predicated region
        $region25: #{tpu_custom_call.1} parent=19 // pred_check
          %p314 = pneg %p76
        $region26: #{tpu_custom_call.1} parent=19 // pred_check_branch
          %316 = sbr.rel (%p314) target = $region28
        $region27: #{tpu_custom_call.1} parent=19 // pred_region
          %p317 = scmp.lt.s32.totalorder %s26, 3
          %s318 = scalar_select %p317, %s26, 3
          %s319 = smul.addr %s318, 4
          %s320 = smul.addr %s319, 8
          %s321 = scalar_lea.vmem %s1, %s320
        $region28: #{tpu_custom_call.1} parent=19 // pred_fallthru
          _
        // Predicated region
        $region29: #{tpu_custom_call.1} parent=19 // pred_check
          %p322 = pneg %p102
        $region30: #{tpu_custom_call.1} parent=19 // pred_check_branch
          %324 = sbr.rel (%p322) target = $region32
        $region31: #{tpu_custom_call.1} parent=19 // pred_region
          %p325 = scmp.lt.s32.totalorder %s26, 3
          %s326 = scalar_select %p325, %s26, 3
          %s327 = smul.addr %s326, 4
          %s328 = smul.addr %s327, 8
          %s329 = scalar_lea.vmem %s2, %s328
        $region32: #{tpu_custom_call.1} parent=19 // pred_fallthru
          _
        // Predicated region
        $region33: #{tpu_custom_call.1} parent=19 // pred_check
          %p330 = pneg %p128
        $region34: #{tpu_custom_call.1} parent=19 // pred_check_branch
          %332 = sbr.rel (%p330) target = $region36
        $region35: #{tpu_custom_call.1} parent=19 // pred_region
          %p333 = scmp.lt.s32.totalorder %s26, 3
          %s334 = scalar_select %p333, %s26, 3
          %s335 = smul.addr %s334, 4
          %s336 = smul.addr %s335, 8
          %s337 = scalar_lea.vmem %s3, %s336
        $region36: #{tpu_custom_call.1} parent=19 // pred_fallthru
          _
        // Predicated region
        $region37: #{tpu_custom_call.1} parent=19 // pred_check
          %p338 = pneg %p154
        $region38: #{tpu_custom_call.1} parent=19 // pred_check_branch
          %340 = sbr.rel (%p338) target = $region40
        $region39: #{tpu_custom_call.1} parent=19 // pred_region
          %p341 = scmp.lt.s32.totalorder %s26, 3
          %s342 = scalar_select %p341, %s26, 3
          %s343 = scalar_lea.vmem %s4, %s342
        $region40: #{tpu_custom_call.1} parent=19 // pred_fallthru
          _
        // Predicated region
        $region41: #{tpu_custom_call.1} parent=19 // pred_check
          %p344 = pneg %p180
        $region42: #{tpu_custom_call.1} parent=19 // pred_check_branch
          %346 = sbr.rel (%p344) target = $region44
        $region43: #{tpu_custom_call.1} parent=19 // pred_region
          %p347 = scmp.lt.s32.totalorder %s26, 3
          %s348 = scalar_select %p347, %s26, 3
          %s349 = scalar_lea.vmem %s5, %s348
        $region44: #{tpu_custom_call.1} parent=19 // pred_fallthru
          _
        // Predicated region
        $region45: #{tpu_custom_call.1} parent=19 // pred_check
          %p350 = pneg %p206
        $region46: #{tpu_custom_call.1} parent=19 // pred_check_branch
          %352 = sbr.rel (%p350) target = $region48
        $region47: #{tpu_custom_call.1} parent=19 // pred_region
          %p353 = scmp.lt.s32.totalorder %s26, 3
          %s354 = scalar_select %p353, %s26, 3
          %s355 = scalar_lea.vmem %s6, %s354
        $region48: #{tpu_custom_call.1} parent=19 // pred_fallthru
          _
        // Predicated region
        $region49: #{tpu_custom_call.1} parent=19 // pred_check
          %p356 = pneg %p232
        $region50: #{tpu_custom_call.1} parent=19 // pred_check_branch
          %358 = sbr.rel (%p356) target = $region52
        $region51: #{tpu_custom_call.1} parent=19 // pred_region
          %p359 = scmp.lt.s32.totalorder %s26, 3
          %s360 = scalar_select %p359, %s26, 3
          %s361 = smul.addr %s360, 8
          %s362 = scalar_lea.vmem %s7, %s361
        $region52: #{tpu_custom_call.1} parent=19 // pred_fallthru
          _
      $region20: #{tpu_custom_call.1} parent=5 // pred_fallthru
        _
      %p363 = scmp.le.s32.totalorder 1, %s18
      %p364 = scmp.lt.s32.totalorder %s18, 9
      %p365 = pnand %p363, %p364
      %p366 = pneg %p365
      // Predicated region
      $region53: #{tpu_custom_call.1} parent=5 // pred_check
        _
      $region54: #{tpu_custom_call.1} parent=5 // pred_check_branch
        %368 = sbr.rel (%p365) target = $region56
      $region55: #{tpu_custom_call.1} parent=5 // pred_region
        %s369 = ssub.s32 %s18, 1
        %p370 = scmp.lt.s32.totalorder %s27, 1
        %s371 = scalar_select %p370, %s27, 1
        %s372 = smul.addr %s371, 8
        %s373 = scalar_lea.vmem %s0, %s372
        %p374 = pneg %p56
        %p375 = pneg %p53
        %p376 = scmp.lt.s32.totalorder %s28, 3
        %s377 = scalar_select %p376, %s28, 3
        %s378 = smul.addr %s377, 4
        %s379 = smul.addr %s378, 8
        %s380 = scalar_lea.vmem %s1, %s379
        %p381 = pneg %p82
        %p382 = pneg %p79
        %p383 = scmp.lt.s32.totalorder %s28, 3
        %s384 = scalar_select %p383, %s28, 3
        %s385 = smul.addr %s384, 4
        %s386 = smul.addr %s385, 8
        %s387 = scalar_lea.vmem %s2, %s386
        %p388 = pneg %p108
        %p389 = pneg %p105
        %p390 = scmp.lt.s32.totalorder %s28, 3
        %s391 = scalar_select %p390, %s28, 3
        %s392 = smul.addr %s391, 4
        %s393 = smul.addr %s392, 8
        %s394 = scalar_lea.vmem %s3, %s393
        %p395 = pneg %p134
        %p396 = pneg %p131
        %p397 = scmp.lt.s32.totalorder %s28, 3
        %s398 = scalar_select %p397, %s28, 3
        %s399 = scalar_lea.vmem %s4, %s398
        %p400 = pneg %p160
        %p401 = pneg %p157
        %p402 = scmp.lt.s32.totalorder %s28, 3
        %s403 = scalar_select %p402, %s28, 3
        %s404 = scalar_lea.vmem %s5, %s403
        %p405 = pneg %p186
        %p406 = pneg %p183
        %p407 = scmp.lt.s32.totalorder %s28, 3
        %s408 = scalar_select %p407, %s28, 3
        %s409 = scalar_lea.vmem %s6, %s408
        %p410 = pneg %p212
        %p411 = pneg %p209
        %p412 = scmp.lt.s32.totalorder %s28, 3
        %s413 = scalar_select %p412, %s28, 3
        %s414 = smul.addr %s413, 8
        %s415 = scalar_lea.vmem %s7, %s414
        %p416 = pneg %p238
        %p417 = pneg %p235
        %p418 = pneg %p259
        %p419 = pneg %p256
        %p420 = pneg %p285
        %p421 = pneg %p282
        %s422 = sand.u32 %s272, 1
        %s423 = scalar_lea.sflag [#allocation3], %s422
        %s424 = sand.u32 %s272, 1
        %s425 = smul.addr %s424, 8
        %s426 = scalar_lea.vmem [#allocation2], %s425
        %p427 = scmp.lt.s32.totalorder %s27, 1
        %s428 = scalar_select %p427, %s27, 1
        %s429 = smul.addr %s428, 8
        %s430 = scalar_lea.vmem %s0, %s429
        %p431 = scmp.lt.s32.totalorder %s28, 3
        %s432 = scalar_select %p431, %s28, 3
        %s433 = smul.addr %s432, 4
        %s434 = smul.addr %s433, 8
        %s435 = scalar_lea.vmem %s1, %s434
        %p436 = scmp.lt.s32.totalorder %s28, 3
        %s437 = scalar_select %p436, %s28, 3
        %s438 = smul.addr %s437, 4
        %s439 = smul.addr %s438, 8
        %s440 = scalar_lea.vmem %s2, %s439
        %p441 = scmp.lt.s32.totalorder %s28, 3
        %s442 = scalar_select %p441, %s28, 3
        %s443 = smul.addr %s442, 4
        %s444 = smul.addr %s443, 8
        %s445 = scalar_lea.vmem %s3, %s444
        %p446 = scmp.lt.s32.totalorder %s28, 3
        %s447 = scalar_select %p446, %s28, 3
        %s448 = scalar_lea.vmem %s4, %s447
        %p449 = scmp.lt.s32.totalorder %s28, 3
        %s450 = scalar_select %p449, %s28, 3
        %s451 = scalar_lea.vmem %s5, %s450
        %p452 = scmp.lt.s32.totalorder %s28, 3
        %s453 = scalar_select %p452, %s28, 3
        %s454 = scalar_lea.vmem %s6, %s453
        %p455 = scmp.lt.s32.totalorder %s28, 3
        %s456 = scalar_select %p455, %s28, 3
        %s457 = smul.addr %s456, 8
        %s458 = scalar_lea.vmem %s7, %s457
        %v459 = vld [vmem:[%s430] sm:$0xff]
        %v460 = vld [vmem:[%s435] sm:$0xff]
        %v461 = vld [vmem:[%s435 + $0x8] sm:$0xff]
        %v462 = vld [vmem:[%s435 + $0x10] sm:$0xff]
        %v463 = vld [vmem:[%s435 + $0x18] sm:$0xff]
        %v464 = vld [vmem:[%s448] sm:$0x1]
        %v466 = vperm.slane %v464, 0
        %vm468 = vcmask 261120
        %v470 = vsel %vm468, %v459, 0
        %472 = vmatpush.msra.mxu0 0.0
        %473 = vmatpush.msra.mxu0 0.0
        %474 = vmatpush.msra.mxu0 0.0
        %475 = vmatpush.msra.mxu0 0.0
        %476 = vmatpush.msra.mxu0 0.0
        %477 = vmatpush.msra.mxu0 0.0
        %478 = vmatpush.msra.mxu0 0.0
        %479 = vmatpush.msra.mxu0 0.0
        %480 = vmatpush.msra.mxu0 0.0
        %481 = vmatpush.msra.mxu0 0.0
        %482 = vmatpush.msra.mxu0 0.0
        %483 = vmatpush.msra.mxu0 0.0
        %484 = vmatpush.msra.mxu0 %v463
        %485 = vmatpush.msra.mxu0 %v462
        %486 = vmatpush.msra.mxu0 %v461
        %487 = vmatpush.msra.mxu0 %v460
        %488 = vmatmul.f32.gmra.mxu0 %v470
        %v489 = vpop.f32.mrf.mxu0
        %v490 = vadd.f32 %v466, %v489
        %491 = vdwg.mxu0
        %v492 = vld [vmem:[%s440] sm:$0xff]
        %v493 = vld [vmem:[%s440 + $0x8] sm:$0xff]
        %v494 = vld [vmem:[%s440 + $0x10] sm:$0xff]
        %v495 = vld [vmem:[%s440 + $0x18] sm:$0xff]
        %v496 = vld [vmem:[%s451] sm:$0x1]
        %v498 = vperm.slane %v496, 0
        %500 = vmatpush.msra.mxu0 0.0
        %501 = vmatpush.msra.mxu0 0.0
        %502 = vmatpush.msra.mxu0 0.0
        %503 = vmatpush.msra.mxu0 0.0
        %504 = vmatpush.msra.mxu0 0.0
        %505 = vmatpush.msra.mxu0 0.0
        %506 = vmatpush.msra.mxu0 0.0
        %507 = vmatpush.msra.mxu0 0.0
        %508 = vmatpush.msra.mxu0 0.0
        %509 = vmatpush.msra.mxu0 0.0
        %510 = vmatpush.msra.mxu0 0.0
        %511 = vmatpush.msra.mxu0 0.0
        %512 = vmatpush.msra.mxu0 %v495
        %513 = vmatpush.msra.mxu0 %v494
        %514 = vmatpush.msra.mxu0 %v493
        %515 = vmatpush.msra.mxu0 %v492
        %516 = vmatmul.f32.gmra.mxu0 %v470
        %v517 = vpop.f32.mrf.mxu0
        %v518 = vadd.f32 %v498, %v517
        %519 = vdwg.mxu0
        %v520 = vld [vmem:[%s445] sm:$0xff]
        %v521 = vld [vmem:[%s445 + $0x8] sm:$0xff]
        %v522 = vld [vmem:[%s445 + $0x10] sm:$0xff]
        %v523 = vld [vmem:[%s445 + $0x18] sm:$0xff]
        %v524 = vld [vmem:[%s454] sm:$0x1]
        %v526 = vperm.slane %v524, 0
        %528 = vmatpush.msra.mxu0 0.0
        %529 = vmatpush.msra.mxu0 0.0
        %530 = vmatpush.msra.mxu0 0.0
        %531 = vmatpush.msra.mxu0 0.0
        %532 = vmatpush.msra.mxu0 0.0
        %533 = vmatpush.msra.mxu0 0.0
        %534 = vmatpush.msra.mxu0 0.0
        %535 = vmatpush.msra.mxu0 0.0
        %536 = vmatpush.msra.mxu0 0.0
        %537 = vmatpush.msra.mxu0 0.0
        %538 = vmatpush.msra.mxu0 0.0
        %539 = vmatpush.msra.mxu0 0.0
        %540 = vmatpush.msra.mxu0 %v523
        %541 = vmatpush.msra.mxu0 %v522
        %542 = vmatpush.msra.mxu0 %v521
        %543 = vmatpush.msra.mxu0 %v520
        %544 = vmatmul.f32.gmra.mxu0 %v470
        %v545 = vpop.f32.mrf.mxu0
        %v546 = vadd.f32 %v526, %v545
        %547 = vdwg.mxu0
        %vm548 = vcmask 64512
        %v550 = vsel %vm548, %v490, 0
        %v553 = vsel %vm548, %v518, 0
        %555 = vmatpush.xpose.msra.mxu0 0.0
        %556 = vmatpush.xpose.msra.mxu0 0.0
        %557 = vmatpush.xpose.msra.mxu0 0.0
        %558 = vmatpush.xpose.msra.mxu0 0.0
        %559 = vmatpush.xpose.msra.mxu0 0.0
        %560 = vmatpush.xpose.msra.mxu0 0.0
        %561 = vmatpush.xpose.msra.mxu0 0.0
        %562 = vmatpush.xpose.msra.mxu0 0.0
        %563 = vmatpush.xpose.msra.mxu0 0.0
        %564 = vmatpush.xpose.msra.mxu0 0.0
        %565 = vmatpush.xpose.msra.mxu0 0.0
        %566 = vmatpush.xpose.msra.mxu0 0.0
        %567 = vmatpush.xpose.msra.mxu0 0.0
        %568 = vmatpush.xpose.msra.mxu0 0.0
        %569 = vmatpush.xpose.msra.mxu0 0.0
        %570 = vmatpush.xpose.msra.mxu0 %v553
        %571 = vmatmul.f32.gmra.mxu0 %v550
        %v572 = vpop.f32.mrf.mxu0
        %v573 = vadd.f32 0.0, %v572
        %574 = vdwg.mxu0
        %v575 = vmul.f32 %v573, 0.35355338
        %v576 = vsel %vm548, %v575, -inf
        %577 = vmax.xlane.f32.xlu0 %v576
        %v578 = vpop.xlane.xlu0 %577
        %v579 = vsub.f32 %v575, %v578
        %v580 = vmul.f32 %v579, 1.442695
        %v581 = vpow.pop %v580
        %v582 = vsel %vm548, %v581, 0.0
        %583 = vadd.xlane.f32.xlu0 %v582
        %v584 = vpop.xlane.xlu0 %583
        %v585 = vrcp.pop %v584
        %v586 = vmul.f32 %v584, %v585
        %v587 = vsub.f32 1.0, %v586
        %v588 = vmul.f32 %v585, %v587
        %v589 = vadd.f32 %v585, %v588
        %vm590 = vweird.f32 %v584
        %vm591 = vweird.f32 %v585
        %vm592 = vmor %vm590, %vm591
        %v593 = vsel %vm592, %v585, %v589
        %v594 = vand.u32 2147483647, %v584
        %vm595 = vcmp.eq.f32.partialorder %v594, 8.507059e+37
        %v596 = vand.u32 %v584, 2147483648
        %v597 = vor.u32 1.1754944e-38, %v596
        %v598 = vsel %vm595, %v597, %v593
        %v599 = vmul.f32 %v581, %v598
        %v601 = vsel %vm548, %v599, 0
        %603 = vmatpush.msra.mxu0 0.0
        %604 = vmatpush.msra.mxu0 0.0
        %605 = vmatpush.msra.mxu0 0.0
        %606 = vmatpush.msra.mxu0 0.0
        %607 = vmatpush.msra.mxu0 0.0
        %608 = vmatpush.msra.mxu0 0.0
        %609 = vmatpush.msra.mxu0 0.0
        %610 = vmatpush.msra.mxu0 0.0
        %611 = vmatpush.msra.mxu0 0.0
        %612 = vmatpush.msra.mxu0 0.0
        %613 = vmatpush.msra.mxu0 0.0
        %614 = vmatpush.msra.mxu0 0.0
        %615 = vmatpush.msra.mxu0 0.0
        %616 = vmatpush.msra.mxu0 0.0
        %617 = vmatpush.msra.mxu0 0.0
        %618 = vmatpush.msra.mxu0 %v546
        %619 = vmatmul.f32.gmra.mxu0 %v601
        %v620 = vpop.f32.mrf.mxu0
        %v621 = vadd.f32 0.0, %v620
        %622 = vdwg.mxu0
        %v623 = vld [vmem:[%s458] sm:$0xff]
        %v625 = vsel %vm548, %v621, 0
        %627 = vmatpush.msra.mxu0 0.0
        %628 = vmatpush.msra.mxu0 0.0
        %629 = vmatpush.msra.mxu0 0.0
        %630 = vmatpush.msra.mxu0 0.0
        %631 = vmatpush.msra.mxu0 0.0
        %632 = vmatpush.msra.mxu0 0.0
        %633 = vmatpush.msra.mxu0 0.0
        %634 = vmatpush.msra.mxu0 0.0
        %635 = vmatpush.msra.mxu0 0.0
        %636 = vmatpush.msra.mxu0 0.0
        %637 = vmatpush.msra.mxu0 0.0
        %638 = vmatpush.msra.mxu0 0.0
        %639 = vmatpush.msra.mxu0 0.0
        %640 = vmatpush.msra.mxu0 0.0
        %641 = vmatpush.msra.mxu0 0.0
        %642 = vmatpush.msra.mxu0 %v623
        %643 = vmatmul.f32.gmra.mxu0 %v625
        %v644 = vpop.f32.mrf.mxu0
        %v645 = vadd.f32 0.0, %v644
        %646 = vdwg.mxu0
        %p647 = scmp.eq.s32.totalorder %s28, 0
        // Predicated region
        $region57: #{tpu_custom_call.1} parent=55 // pred_check
          %p648 = pneg %p647
        $region58: #{tpu_custom_call.1} parent=55 // pred_check_branch
          %650 = sbr.rel (%p648) target = $region60
        $region59: #{tpu_custom_call.1} parent=55 // pred_region
          %v651 = vld [vmem:[%s8] sm:$0x1]
          %v653 = vperm.slane %v651, 0
          %655 = vst.msk [vmem:[%s426] sm:$0xff] %vm468, %v653
        $region60: #{tpu_custom_call.1} parent=55 // pred_fallthru
          _
        %v656 = vld [vmem:[%s426] sm:$0xff]
        %v657 = vadd.f32 %v656, %v645
        %658 = vst.msk [vmem:[%s426] sm:$0xff] %vm468, %v657
        %s659 = sand.u32 %s272, 1
        %s660 = scalar_lea.sflag [#allocation3], %s659
        %s661 = sand.u32 %s272, 1
        %s662 = smul.addr %s661, 8
        %s663 = scalar_lea.vmem [#allocation2], %s662
        // Predicated region
        $region61: #{tpu_custom_call.1} parent=55 // pred_check
          %p664 = pneg %p282
        $region62: #{tpu_custom_call.1} parent=55 // pred_check_branch
          %666 = sbr.rel (%p664) target = $region64
        $region63: #{tpu_custom_call.1} parent=55 // pred_region
          %668 = vsyncadd %s660, 0
          %s669 = smul.addr %s27, 8
          %s670 = scalar_lea.hbm %s9, %s669
          %s672 = sshll.u32 %s663, 4
          %s673 = int_to_ptr.vmem [resolvable:$true] %s672
          %s674 = sshll.u32 %s670, 4
          %s675 = int_to_ptr.hbm [resolvable:$true] %s674
          %677 = dma.vmem_to_hbm [thread:$0]  %s673, 128, %s675, %s660
        $region64: #{tpu_custom_call.1} parent=55 // pred_fallthru
          _
      $region56: #{tpu_custom_call.1} parent=5 // pred_fallthru
        _
      %p678 = scmp.le.s32.totalorder 2, %s18
      // Predicated region
      $region65: #{tpu_custom_call.1} parent=5 // pred_check
        %p679 = pneg %p678
      $region66: #{tpu_custom_call.1} parent=5 // pred_check_branch
        %681 = sbr.rel (%p679) target = $region68
      $region67: #{tpu_custom_call.1} parent=5 // pred_region
        %s682 = ssub.s32 %s18, 2
        // Predicated region
        $region69: #{tpu_custom_call.1} parent=67 // pred_check
          %p683 = pneg %p288
        $region70: #{tpu_custom_call.1} parent=67 // pred_check_branch
          %685 = sbr.rel (%p683) target = $region72
        $region71: #{tpu_custom_call.1} parent=67 // pred_region
          %s686 = sand.u32 %s273, 1
          %s687 = scalar_lea.sflag [#allocation3], %s686
          %s688 = sand.u32 %s273, 1
          %s689 = smul.addr %s688, 8
          %s690 = scalar_lea.vmem [#allocation2], %s689
          %692 = dma.done %s687, 128
        $region72: #{tpu_custom_call.1} parent=67 // pred_fallthru
          _
      $region68: #{tpu_custom_call.1} parent=5 // pred_fallthru
        _
    $region6: #{tpu_custom_call.1} parent=1 // loop_footer
      %s22 = sadd.s32 1, %s18
    $region7: #{tpu_custom_call.1} parent=1 // loop_footer_branch
      %17 = sbr.rel target = $region3
    $region8: #{tpu_custom_call.1} parent=1 // loop_exit
      _
    %693 = vsyncpa [#allocation3], 1
    %s694 = scalar_lea.sflag [#allocation3], 1
    %695 = vsyncpa %s694, 1

</llo_original>
